<compile_context>
chip_gen: v6e
topology: v6e:2x2x1
jax: 0.10.0
libtpu: 0.0.40
codegen_flags: <defaults>
</compile_context>

<pallas_src>
import math

import jax
import jax.numpy as jnp
from jax import lax
from jax.experimental import pallas as pl
from jax.experimental.pallas import tpu as pltpu

LANE = 128
_VMEM_TILE_BUDGET = 12 * 1024 * 1024   # bytes, across both pipeline buffers
_MAX_FULL_MODE_TILE = 2048             # use full-extent mode tile up to this


def _cdiv(a, b):
    return -(-a // b)


def _spectral_mix_kernel(xr_ref, xi_ref, wr_ref, wi_ref, or_ref, oi_ref):
    """One (mode block, batch block) tile of
         out[b, o, m] = sum_i x[b, i, m] * w[i, o, m]   (complex operands)
    carried as separate real/imag f32 planes, modes lane-dense.

    xr_ref, xi_ref : (tb, Cin, tm)
    wr_ref, wi_ref : (Cin, Cout, tm)
    or_ref, oi_ref : (tb, Cout, tm)
    """
    cin = xr_ref.shape[1]
    acc_r = None
    acc_i = None
    # Channel counts in Burger-FNO are small (4..64): a static unroll of VPU
    # broadcast-MACs with modes staying in lanes.  See TODO(synk) above for
    # the MXU route once 2*Cin >= 128.
    for i in range(cin):
        xr_i = xr_ref[:, i:i + 1, :]       # (tb, 1, tm)
        xi_i = xi_ref[:, i:i + 1, :]
        wr_i = wr_ref[i:i + 1, :, :]       # (1, Cout, tm)
        wi_i = wi_ref[i:i + 1, :, :]
        pr = xr_i * wr_i - xi_i * wi_i     # real part of this channel's product
        pi = xr_i * wi_i + xi_i * wr_i     # imag part
        if i == 0:
            acc_r, acc_i = pr, pi          # init with first product (no zeros pass)
        else:
            acc_r = acc_r + pr
            acc_i = acc_i + pi
    or_ref[...] = acc_r
    oi_ref[...] = acc_i


def compl_mul1d_pallas(xr, xi, wr, wi):
    """einsum('bix,iox->box') over complex operands given as real/imag planes.

    xr, xi : (B, Cin, M) float32   -- x_ft already truncated to the kept modes
    wr, wi : (Cin, Cout, M) float32
    returns (out_r, out_i), each (B, Cout, M) float32
    """
    B, Cin, M = xr.shape
    Cout = wr.shape[1]

    # --- mode tile: exact extent (no padding) unless the mode axis is huge ---
    tm = M if M <= _MAX_FULL_MODE_TILE else _MAX_FULL_MODE_TILE  # 2048 % 128 == 0
    nm = _cdiv(M, tm)

    # --- batch tile: fill the VMEM budget, but keep >= 2 grid steps (v7x) ----
    w_tile_bytes = 2 * 4 * Cin * Cout * tm              # wr + wi tiles
    row_bytes = 2 * 4 * tm * (Cin + Cout)               # x r/i + out r/i per row
    tb = (_VMEM_TILE_BUDGET // 2 - w_tile_bytes) // max(row_bytes, 1)
    tb = max(1, min(tb, B, _cdiv(B, 2) if B > 1 else 1))
    nb = _cdiv(B, tb)

    grid_spec = pltpu.PrefetchScalarGridSpec(
        num_scalar_prefetch=0,
        grid=(nm, nb),
        in_specs=[
            pl.BlockSpec((tb, Cin, tm), lambda m, b: (b, 0, m)),
            pl.BlockSpec((tb, Cin, tm), lambda m, b: (b, 0, m)),
            pl.BlockSpec((Cin, Cout, tm), lambda m, b: (0, 0, m)),
            pl.BlockSpec((Cin, Cout, tm), lambda m, b: (0, 0, m)),
        ],
        out_specs=[
            pl.BlockSpec((tb, Cout, tm), lambda m, b: (b, 0, m)),
            pl.BlockSpec((tb, Cout, tm), lambda m, b: (b, 0, m)),
        ],
    )

    out_r, out_i = pl.pallas_call(
        _spectral_mix_kernel,
        grid_spec=grid_spec,
        out_shape=(
            jax.ShapeDtypeStruct((B, Cout, M), jnp.float32),
            jax.ShapeDtypeStruct((B, Cout, M), jnp.float32),
        ),
        compiler_params=pltpu.CompilerParams(
            dimension_semantics=("parallel", "parallel"),  # shards on v7x's 2 TCs
            vmem_limit_bytes=32 * 1024 * 1024,             # safe on v5e/v6e/v7x
        ),
        cost_estimate=pl.CostEstimate(
            flops=8 * B * Cin * Cout * M,
            transcendentals=0,
            bytes_accessed=8 * M * (B * Cin + Cin * Cout + B * Cout),
        ),
    )(xr, xi, wr, wi)
    return out_r, out_i


def fourier_layer_forward(x, weights1, modes1):
    """Forward pass of FourierLayer.

    x       : (B, Cin, N) float32
    weights1: (Cin, Cout, modes1) complex64
    returns : (B, Cout, N) float32
    """
    B, Cin, N = x.shape
    Cout = weights1.shape[1]
    n_freq = N // 2 + 1

    # TODO(synk): rfft/irfft stay as XLA ops (no Pallas FFT primitive).
    x_ft = jnp.fft.rfft(x, axis=-1)                       # (B, Cin, n_freq) c64
    x_m = x_ft[:, :, :modes1]
    xr = jnp.real(x_m).astype(jnp.float32)
    xi = jnp.imag(x_m).astype(jnp.float32)
    wr = jnp.real(weights1).astype(jnp.float32)
    wi = jnp.imag(weights1).astype(jnp.float32)

    out_r, out_i = compl_mul1d_pallas(xr, xi, wr, wi)     # (B, Cout, modes1) x2

    # Single fused XLA pass: complex-combine + zero-extend to n_freq.  This
    # buffer must be materialised for irfft regardless of who writes the zeros.
    out_ft = jnp.zeros((B, Cout, n_freq), jnp.complex64)
    out_ft = out_ft.at[:, :, :modes1].set(lax.complex(out_r, out_i))
    return jnp.fft.irfft(out_ft, n=N, axis=-1)            # (B, Cout, N) f32


def init_weights1(key, in_channels, out_channels, modes1):
    """Deterministic stand-in for kaiming_normal_(cfloat, fan_in, relu).

    (Not an exact match of torch's fan-in rule on a cfloat tensor; irrelevant
    to the kernel math -- weights are parameters fed from outside.)
    """
    fan_in = out_channels * modes1
    std = math.sqrt(2.0) / math.sqrt(fan_in)
    kr, ki = jax.random.split(key)
    comp_std = std / math.sqrt(2.0)
    wr = jax.random.normal(kr, (in_channels, out_channels, modes1),
                           jnp.float32) * comp_std
    wi = jax.random.normal(ki, (in_channels, out_channels, modes1),
                           jnp.float32) * comp_std
    return (wr + 1j * wi).astype(jnp.complex64)


if __name__ == "__main__":
    B, Cin, Cout, N, modes1 = 2, 4, 4, 16, 8

    key = jax.random.PRNGKey(0)
    k_x, k_w = jax.random.split(key)
    x = jax.random.normal(k_x, (B, Cin, N), dtype=jnp.float32)
    weights1 = init_weights1(k_w, Cin, Cout, modes1)

    out = fourier_layer_forward(x, weights1, modes1)
    out = jax.block_until_ready(out)

    # Pure-JAX reference (mirrors the PyTorch forward exactly).
    x_ft = jnp.fft.rfft(x, axis=-1)
    ref_m = jnp.einsum('bix,iox->box', x_ft[:, :, :modes1], weights1)
    ref_ft = jnp.zeros((B, Cout, N // 2 + 1), jnp.complex64)
    ref_ft = ref_ft.at[:, :, :modes1].set(ref_m)
    ref = jnp.fft.irfft(ref_ft, n=N, axis=-1)

    assert out.shape == (B, Cout, N), out.shape
    assert out.dtype == jnp.float32, out.dtype
    assert jnp.allclose(out, ref, atol=1e-5, rtol=1e-5), "mismatch vs reference"

    print("KERNEL_OK")
</pallas_src>

<mosaic_0001>
module attributes {stable_mosaic.version = 11 : i64} {
  func.func @_spectral_mix_kernel(%arg0: i32, %arg1: i32, %arg2: memref<1x4x8xf32, #tpu.memory_space<vmem>>, %arg3: memref<1x4x8xf32, #tpu.memory_space<vmem>>, %arg4: memref<4x4x8xf32, #tpu.memory_space<vmem>>, %arg5: memref<4x4x8xf32, #tpu.memory_space<vmem>>, %arg6: memref<1x4x8xf32, #tpu.memory_space<vmem>>, %arg7: memref<1x4x8xf32, #tpu.memory_space<vmem>>) attributes {dimension_semantics = [#tpu.dimension_semantics<parallel>, #tpu.dimension_semantics<parallel>], iteration_bounds = array<i64: 1, 2>, scalar_prefetch = 0 : i64, scratch_operands = 0 : i64, tpu.core_type = #tpu.core_type<tc>, window_params = [{transform_indices = @transform_0, window_bounds = array<i64: 1, 4, 8>}, {transform_indices = @transform_1, window_bounds = array<i64: 1, 4, 8>}, {transform_indices = @transform_2, window_bounds = array<i64: 4, 4, 8>}, {transform_indices = @transform_3, window_bounds = array<i64: 4, 4, 8>}, {transform_indices = @transform_4, window_bounds = array<i64: 1, 4, 8>}, {transform_indices = @transform_5, window_bounds = array<i64: 1, 4, 8>}]} {
    %c0 = arith.constant 0 : index
    %c0_0 = arith.constant 0 : index
    %c0_1 = arith.constant 0 : index
    %0 = vector.load %arg2[%c0, %c0_0, %c0_1] : memref<1x4x8xf32, #tpu.memory_space<vmem>>, vector<1x1x8xf32>
    %c0_2 = arith.constant 0 : index
    %c0_3 = arith.constant 0 : index
    %c0_4 = arith.constant 0 : index
    %1 = vector.load %arg3[%c0_2, %c0_3, %c0_4] : memref<1x4x8xf32, #tpu.memory_space<vmem>>, vector<1x1x8xf32>
    %c0_5 = arith.constant 0 : index
    %c0_6 = arith.constant 0 : index
    %c0_7 = arith.constant 0 : index
    %2 = vector.load %arg4[%c0_5, %c0_6, %c0_7] : memref<4x4x8xf32, #tpu.memory_space<vmem>>, vector<1x4x8xf32>
    %c0_8 = arith.constant 0 : index
    %c0_9 = arith.constant 0 : index
    %c0_10 = arith.constant 0 : index
    %3 = vector.load %arg5[%c0_8, %c0_9, %c0_10] : memref<4x4x8xf32, #tpu.memory_space<vmem>>, vector<1x4x8xf32>
    %4 = vector.broadcast %0 : vector<1x1x8xf32> to vector<1x4x8xf32>
    %5 = arith.mulf %4, %2 : vector<1x4x8xf32>
    %6 = vector.broadcast %1 : vector<1x1x8xf32> to vector<1x4x8xf32>
    %7 = arith.mulf %6, %3 : vector<1x4x8xf32>
    %8 = arith.subf %5, %7 : vector<1x4x8xf32>
    %9 = vector.broadcast %0 : vector<1x1x8xf32> to vector<1x4x8xf32>
    %10 = arith.mulf %9, %3 : vector<1x4x8xf32>
    %11 = vector.broadcast %1 : vector<1x1x8xf32> to vector<1x4x8xf32>
    %12 = arith.mulf %11, %2 : vector<1x4x8xf32>
    %13 = arith.addf %10, %12 : vector<1x4x8xf32>
    %c0_11 = arith.constant 0 : index
    %c1 = arith.constant 1 : index
    %c0_12 = arith.constant 0 : index
    %14 = vector.load %arg2[%c0_11, %c1, %c0_12] : memref<1x4x8xf32, #tpu.memory_space<vmem>>, vector<1x1x8xf32>
    %c0_13 = arith.constant 0 : index
    %c1_14 = arith.constant 1 : index
    %c0_15 = arith.constant 0 : index
    %15 = vector.load %arg3[%c0_13, %c1_14, %c0_15] : memref<1x4x8xf32, #tpu.memory_space<vmem>>, vector<1x1x8xf32>
    %c1_16 = arith.constant 1 : index
    %c0_17 = arith.constant 0 : index
    %c0_18 = arith.constant 0 : index
    %16 = vector.load %arg4[%c1_16, %c0_17, %c0_18] : memref<4x4x8xf32, #tpu.memory_space<vmem>>, vector<1x4x8xf32>
    %c1_19 = arith.constant 1 : index
    %c0_20 = arith.constant 0 : index
    %c0_21 = arith.constant 0 : index
    %17 = vector.load %arg5[%c1_19, %c0_20, %c0_21] : memref<4x4x8xf32, #tpu.memory_space<vmem>>, vector<1x4x8xf32>
    %18 = vector.broadcast %14 : vector<1x1x8xf32> to vector<1x4x8xf32>
    %19 = arith.mulf %18, %16 : vector<1x4x8xf32>
    %20 = vector.broadcast %15 : vector<1x1x8xf32> to vector<1x4x8xf32>
    %21 = arith.mulf %20, %17 : vector<1x4x8xf32>
    %22 = arith.subf %19, %21 : vector<1x4x8xf32>
    %23 = vector.broadcast %14 : vector<1x1x8xf32> to vector<1x4x8xf32>
    %24 = arith.mulf %23, %17 : vector<1x4x8xf32>
    %25 = vector.broadcast %15 : vector<1x1x8xf32> to vector<1x4x8xf32>
    %26 = arith.mulf %25, %16 : vector<1x4x8xf32>
    %27 = arith.addf %24, %26 : vector<1x4x8xf32>
    %28 = arith.addf %8, %22 : vector<1x4x8xf32>
    %29 = arith.addf %13, %27 : vector<1x4x8xf32>
    %c0_22 = arith.constant 0 : index
    %c2 = arith.constant 2 : index
    %c0_23 = arith.constant 0 : index
    %30 = vector.load %arg2[%c0_22, %c2, %c0_23] : memref<1x4x8xf32, #tpu.memory_space<vmem>>, vector<1x1x8xf32>
    %c0_24 = arith.constant 0 : index
    %c2_25 = arith.constant 2 : index
    %c0_26 = arith.constant 0 : index
    %31 = vector.load %arg3[%c0_24, %c2_25, %c0_26] : memref<1x4x8xf32, #tpu.memory_space<vmem>>, vector<1x1x8xf32>
    %c2_27 = arith.constant 2 : index
    %c0_28 = arith.constant 0 : index
    %c0_29 = arith.constant 0 : index
    %32 = vector.load %arg4[%c2_27, %c0_28, %c0_29] : memref<4x4x8xf32, #tpu.memory_space<vmem>>, vector<1x4x8xf32>
    %c2_30 = arith.constant 2 : index
    %c0_31 = arith.constant 0 : index
    %c0_32 = arith.constant 0 : index
    %33 = vector.load %arg5[%c2_30, %c0_31, %c0_32] : memref<4x4x8xf32, #tpu.memory_space<vmem>>, vector<1x4x8xf32>
    %34 = vector.broadcast %30 : vector<1x1x8xf32> to vector<1x4x8xf32>
    %35 = arith.mulf %34, %32 : vector<1x4x8xf32>
    %36 = vector.broadcast %31 : vector<1x1x8xf32> to vector<1x4x8xf32>
    %37 = arith.mulf %36, %33 : vector<1x4x8xf32>
    %38 = arith.subf %35, %37 : vector<1x4x8xf32>
    %39 = vector.broadcast %30 : vector<1x1x8xf32> to vector<1x4x8xf32>
    %40 = arith.mulf %39, %33 : vector<1x4x8xf32>
    %41 = vector.broadcast %31 : vector<1x1x8xf32> to vector<1x4x8xf32>
    %42 = arith.mulf %41, %32 : vector<1x4x8xf32>
    %43 = arith.addf %40, %42 : vector<1x4x8xf32>
    %44 = arith.addf %28, %38 : vector<1x4x8xf32>
    %45 = arith.addf %29, %43 : vector<1x4x8xf32>
    %c0_33 = arith.constant 0 : index
    %c3 = arith.constant 3 : index
    %c0_34 = arith.constant 0 : index
    %46 = vector.load %arg2[%c0_33, %c3, %c0_34] : memref<1x4x8xf32, #tpu.memory_space<vmem>>, vector<1x1x8xf32>
    %c0_35 = arith.constant 0 : index
    %c3_36 = arith.constant 3 : index
    %c0_37 = arith.constant 0 : index
    %47 = vector.load %arg3[%c0_35, %c3_36, %c0_37] : memref<1x4x8xf32, #tpu.memory_space<vmem>>, vector<1x1x8xf32>
    %c3_38 = arith.constant 3 : index
    %c0_39 = arith.constant 0 : index
    %c0_40 = arith.constant 0 : index
    %48 = vector.load %arg4[%c3_38, %c0_39, %c0_40] : memref<4x4x8xf32, #tpu.memory_space<vmem>>, vector<1x4x8xf32>
    %c3_41 = arith.constant 3 : index
    %c0_42 = arith.constant 0 : index
    %c0_43 = arith.constant 0 : index
    %49 = vector.load %arg5[%c3_41, %c0_42, %c0_43] : memref<4x4x8xf32, #tpu.memory_space<vmem>>, vector<1x4x8xf32>
    %50 = vector.broadcast %46 : vector<1x1x8xf32> to vector<1x4x8xf32>
    %51 = arith.mulf %50, %48 : vector<1x4x8xf32>
    %52 = vector.broadcast %47 : vector<1x1x8xf32> to vector<1x4x8xf32>
    %53 = arith.mulf %52, %49 : vector<1x4x8xf32>
    %54 = arith.subf %51, %53 : vector<1x4x8xf32>
    %55 = vector.broadcast %46 : vector<1x1x8xf32> to vector<1x4x8xf32>
    %56 = arith.mulf %55, %49 : vector<1x4x8xf32>
    %57 = vector.broadcast %47 : vector<1x1x8xf32> to vector<1x4x8xf32>
    %58 = arith.mulf %57, %48 : vector<1x4x8xf32>
    %59 = arith.addf %56, %58 : vector<1x4x8xf32>
    %60 = arith.addf %44, %54 : vector<1x4x8xf32>
    %61 = arith.addf %45, %59 : vector<1x4x8xf32>
    %c0_44 = arith.constant 0 : index
    %c0_45 = arith.constant 0 : index
    %c0_46 = arith.constant 0 : index
    %62 = vector.load %arg6[%c0_44, %c0_45, %c0_46] : memref<1x4x8xf32, #tpu.memory_space<vmem>>, vector<1x4x8xf32>
    tpu.vector_store %arg6[%c0_44, %c0_45, %c0_46], %60 {strides = array<i32>} : memref<1x4x8xf32, #tpu.memory_space<vmem>>, vector<1x4x8xf32>,
    %c0_47 = arith.constant 0 : index
    %c0_48 = arith.constant 0 : index
    %c0_49 = arith.constant 0 : index
    %63 = vector.load %arg7[%c0_47, %c0_48, %c0_49] : memref<1x4x8xf32, #tpu.memory_space<vmem>>, vector<1x4x8xf32>
    tpu.vector_store %arg7[%c0_47, %c0_48, %c0_49], %61 {strides = array<i32>} : memref<1x4x8xf32, #tpu.memory_space<vmem>>, vector<1x4x8xf32>,
    return
  }
  func.func @transform_0(%arg0: i32, %arg1: i32) -> (i32, i32, i32) {
    %c0_i32 = arith.constant 0 : i32
    %c0_i32_0 = arith.constant 0 : i32
    return %arg1, %c0_i32, %arg0 : i32, i32, i32
  }
  func.func @transform_1(%arg0: i32, %arg1: i32) -> (i32, i32, i32) {
    %c0_i32 = arith.constant 0 : i32
    %c0_i32_0 = arith.constant 0 : i32
    return %arg1, %c0_i32, %arg0 : i32, i32, i32
  }
  func.func @transform_2(%arg0: i32, %arg1: i32) -> (i32, i32, i32) {
    %c0_i32 = arith.constant 0 : i32
    %c0_i32_0 = arith.constant 0 : i32
    %c0_i32_1 = arith.constant 0 : i32
    return %c0_i32, %c0_i32_0, %arg0 : i32, i32, i32
  }
  func.func @transform_3(%arg0: i32, %arg1: i32) -> (i32, i32, i32) {
    %c0_i32 = arith.constant 0 : i32
    %c0_i32_0 = arith.constant 0 : i32
    %c0_i32_1 = arith.constant 0 : i32
    return %c0_i32, %c0_i32_0, %arg0 : i32, i32, i32
  }
  func.func @transform_4(%arg0: i32, %arg1: i32) -> (i32, i32, i32) {
    %c0_i32 = arith.constant 0 : i32
    %c0_i32_0 = arith.constant 0 : i32
    return %arg1, %c0_i32, %arg0 : i32, i32, i32
  }
  func.func @transform_5(%arg0: i32, %arg1: i32) -> (i32, i32, i32) {
    %c0_i32 = arith.constant 0 : i32
    %c0_i32_0 = arith.constant 0 : i32
    return %arg1, %c0_i32, %arg0 : i32, i32, i32
  }
}

</mosaic_0001>

<llo_original>
// kernel: tpu_custom_call.1
$region0: #{tpu_custom_call.1}
  #allocation0 [shape = 'u32[]', space=smem, size = 0x4, offset = 0x4, fixed_abs, tag = 'smem constant byte address 0x4 - core index']
  #allocation1 [shape = 'u32[144,128]{1,0:T(1,128)}', space=vmem, size = 0x12000, scoped, tag = 'internal scratch']
  %s0 = inlined_call_operand.hbm [shape: f32[2,4,8], index: 0, kind: input, shape index: {}]
  %s1 = inlined_call_operand.hbm [shape: f32[2,4,8], index: 1, kind: input, shape index: {}]
  %s2 = inlined_call_operand.hbm [shape: f32[4,4,8], index: 2, kind: input, shape index: {}]
  %s3 = inlined_call_operand.hbm [shape: f32[4,4,8], index: 3, kind: input, shape index: {}]
  %s4 = inlined_call_operand.hbm [shape: f32[2,4,8], index: 4, kind: output, shape index: {0}]
  %s5 = inlined_call_operand.hbm [shape: f32[2,4,8], index: 5, kind: output, shape index: {1}]
  %6 = xla_tuple %s4, %s5
  %s7 = sld [smem:[#allocation0]]
  $region73: #{tpu_custom_call.1} parent=0
    _
  %s9 = ssub.s32 1, %s7
  %s10 = scalar_select 0, %s9, %s7
  $region1: #{tpu_custom_call.1} parent=0
    #allocation2 [shape = 'u8[4096]{0}', space=vmem, size = 0x1000, scoped, tag = 'input window, operand 0']
    #allocation3 [shape = 's32[2]{0}', space=sflag, size = 0x8, scoped, tag = 'scoped memory for tpu_custom_call.1']
    #allocation4 [shape = 's32[2]{0}', space=sflag, size = 0x8, scoped, tag = 'scoped memory for tpu_custom_call.1']
    #allocation5 [shape = 'u8[4096]{0}', space=vmem, size = 0x1000, scoped, tag = 'input window, operand 1']
    #allocation6 [shape = 's32[2]{0}', space=sflag, size = 0x8, scoped, tag = 'scoped memory for tpu_custom_call.1']
    #allocation7 [shape = 'u8[8192]{0}', space=vmem, size = 0x2000, scoped, tag = 'input window, operand 2, single buffered']
    #allocation8 [shape = 'u8[8192]{0}', space=vmem, size = 0x2000, scoped, tag = 'input window, operand 3, single buffered']
    #allocation9 [shape = 's32[1]{0}', space=sflag, size = 0x4, scoped, tag = 'scoped memory for tpu_custom_call.1']
    #allocation10 [shape = 'u8[4096]{0}', space=vmem, size = 0x1000, scoped, tag = 'output window, operand 0']
    #allocation11 [shape = 'u8[4096]{0}', space=vmem, size = 0x1000, scoped, tag = 'output window, operand 1']
    #allocation12 [shape = 's32[2]{0}', space=sflag, size = 0x8, scoped, tag = 'scoped memory for tpu_custom_call.1']
    %11 = vsyncpa [#allocation3], 0
    %s12 = scalar_lea.sflag [#allocation3], 1
    %13 = vsyncpa %s12, 0
    %14 = vsyncpa [#allocation6], 0
    %s15 = scalar_lea.sflag [#allocation6], 1
    %16 = vsyncpa %s15, 0
    %17 = vsyncpa [#allocation9], 0
    %18 = vsyncpa [#allocation4], 0
    %s19 = scalar_lea.sflag [#allocation4], 1
    %20 = vsyncpa %s19, 0
    %21 = vsyncpa [#allocation12], 0
    %s22 = scalar_lea.sflag [#allocation12], 1
    %23 = vsyncpa %s22, 0
    loop: start=0, step=1, limit=4
    $region2: #{tpu_custom_call.1} parent=1 // loop_pre_header
      _
    $region3: #{tpu_custom_call.1} parent=1 // loop_header
      %s25 = sphi 0, %s29
      %p26 = scmp.ge.s32.totalorder %s25, 4
      %s32 = sphi 0, %s44
      %s33 = sphi 0, %s40
      %s34 = sphi 0, %s32
      %s35 = sphi 0, %s33
      %s36 = sphi 0, %s34
      %s37 = sphi 0, %s35
      %s49 = sphi 0, %s51
      %s52 = sphi 0, %s49
      %s53 = sphi 0, %s52
      %s69 = sphi 0, %s53
      %s77 = sphi 0, %s79
      %s80 = sphi 0, %s77
      %s81 = sphi 0, %s80
      %s97 = sphi 0, %s81
      %s103 = sphi 0, %s105
      %s106 = sphi 0, %s103
      %s107 = sphi 0, %s106
      %s123 = sphi 0, %s107
      %s129 = sphi 0, %s131
      %s132 = sphi 0, %s129
      %s133 = sphi 0, %s132
      %s149 = sphi 0, %s133
      %s157 = sphi 0, %s159
      %s160 = sphi 0, %s157
      %s161 = sphi 0, %s160
      %s177 = sphi 0, %s161
      %s185 = sphi 0, %s187
      %s188 = sphi 0, %s185
      %s189 = sphi 0, %s188
      %s205 = sphi 0, %s189
    $region4: #{tpu_custom_call.1} parent=1 // loop_header_branch
      %28 = sbr.rel (%p26) target = $region8
    $region5: #{tpu_custom_call.1} parent=1 // loop_body
      %s30 = ssub.s32 %s25, 1
      %s31 = ssub.s32 %s25, 2
      %s38 = sadd.s32 1, %s33
      %p39 = scmp.ge.s32.totalorder %s38, 2
      %s40 = scalar_select %p39, 0, %s38
      %s41 = sadd.s32 1, %s32
      %s42 = scalar_select %p39, %s41, %s32
      %p43 = scmp.ge.s32.totalorder %s42, 1
      %s44 = scalar_select %p43, 0, %s42
      %s45 = ssub.s32 %s33, %s40
      %s46 = ssub.s32 %s32, %s44
      %s47 = sor.u32 %s45, %s46
      %p48 = scmp.eq.s32.totalorder %s47, 0
      %s50 = sadd.s32 %s49, 1
      %s51 = scalar_select %p48, %s49, %s50
      %p54 = pneg %p48
      %p55 = scmp.eq.s32.totalorder %s25, 1
      %p56 = por %p54, %p55
      %p57 = scmp.ne.s32.totalorder %s49, %s52
      %p58 = scmp.eq.s32.totalorder %s25, 0
      %p59 = por %p57, %p58
      %p60 = scmp.ne.s32.totalorder %s49, %s52
      %p61 = scmp.eq.s32.totalorder %s30, 1
      %p62 = por %p60, %p61
      %p63 = scmp.ne.s32.totalorder %s52, %s53
      %p64 = scmp.eq.s32.totalorder %s30, 0
      %p65 = por %p63, %p64
      %p66 = scmp.ne.s32.totalorder %s52, %s53
      %p67 = scmp.eq.s32.totalorder %s31, 1
      %p68 = por %p66, %p67
      %p70 = scmp.ne.s32.totalorder %s53, %s69
      %p71 = scmp.eq.s32.totalorder %s31, 0
      %p72 = por %p70, %p71
      %s73 = ssub.s32 %s33, %s40
      %s74 = ssub.s32 %s32, %s44
      %s75 = sor.u32 %s73, %s74
      %p76 = scmp.eq.s32.totalorder %s75, 0
      %s78 = sadd.s32 %s77, 1
      %s79 = scalar_select %p76, %s77, %s78
      %p82 = pneg %p76
      %p83 = scmp.eq.s32.totalorder %s25, 1
      %p84 = por %p82, %p83
      %p85 = scmp.ne.s32.totalorder %s77, %s80
      %p86 = scmp.eq.s32.totalorder %s25, 0
      %p87 = por %p85, %p86
      %p88 = scmp.ne.s32.totalorder %s77, %s80
      %p89 = scmp.eq.s32.totalorder %s30, 1
      %p90 = por %p88, %p89
      %p91 = scmp.ne.s32.totalorder %s80, %s81
      %p92 = scmp.eq.s32.totalorder %s30, 0
      %p93 = por %p91, %p92
      %p94 = scmp.ne.s32.totalorder %s80, %s81
      %p95 = scmp.eq.s32.totalorder %s31, 1
      %p96 = por %p94, %p95
      %p98 = scmp.ne.s32.totalorder %s81, %s97
      %p99 = scmp.eq.s32.totalorder %s31, 0
      %p100 = por %p98, %p99
      %s101 = ssub.s32 %s32, %s44
      %p102 = scmp.eq.s32.totalorder %s101, 0
      %s104 = sadd.s32 %s103, 1
      %s105 = scalar_select %p102, %s103, %s104
      %p108 = pneg %p102
      %p109 = scmp.eq.s32.totalorder %s25, 1
      %p110 = por %p108, %p109
      %p111 = scmp.ne.s32.totalorder %s103, %s106
      %p112 = scmp.eq.s32.totalorder %s25, 0
      %p113 = por %p111, %p112
      %p114 = scmp.ne.s32.totalorder %s103, %s106
      %p115 = scmp.eq.s32.totalorder %s30, 1
      %p116 = por %p114, %p115
      %p117 = scmp.ne.s32.totalorder %s106, %s107
      %p118 = scmp.eq.s32.totalorder %s30, 0
      %p119 = por %p117, %p118
      %p120 = scmp.ne.s32.totalorder %s106, %s107
      %p121 = scmp.eq.s32.totalorder %s31, 1
      %p122 = por %p120, %p121
      %p124 = scmp.ne.s32.totalorder %s107, %s123
      %p125 = scmp.eq.s32.totalorder %s31, 0
      %p126 = por %p124, %p125
      %s127 = ssub.s32 %s32, %s44
      %p128 = scmp.eq.s32.totalorder %s127, 0
      %s130 = sadd.s32 %s129, 1
      %s131 = scalar_select %p128, %s129, %s130
      %p134 = pneg %p128
      %p135 = scmp.eq.s32.totalorder %s25, 1
      %p136 = por %p134, %p135
      %p137 = scmp.ne.s32.totalorder %s129, %s132
      %p138 = scmp.eq.s32.totalorder %s25, 0
      %p139 = por %p137, %p138
      %p140 = scmp.ne.s32.totalorder %s129, %s132
      %p141 = scmp.eq.s32.totalorder %s30, 1
      %p142 = por %p140, %p141
      %p143 = scmp.ne.s32.totalorder %s132, %s133
      %p144 = scmp.eq.s32.totalorder %s30, 0
      %p145 = por %p143, %p144
      %p146 = scmp.ne.s32.totalorder %s132, %s133
      %p147 = scmp.eq.s32.totalorder %s31, 1
      %p148 = por %p146, %p147
      %p150 = scmp.ne.s32.totalorder %s133, %s149
      %p151 = scmp.eq.s32.totalorder %s31, 0
      %p152 = por %p150, %p151
      %s153 = ssub.s32 %s33, %s40
      %s154 = ssub.s32 %s32, %s44
      %s155 = sor.u32 %s153, %s154
      %p156 = scmp.eq.s32.totalorder %s155, 0
      %s158 = sadd.s32 %s157, 1
      %s159 = scalar_select %p156, %s157, %s158
      %p162 = pneg %p156
      %p163 = scmp.eq.s32.totalorder %s25, 1
      %p164 = por %p162, %p163
      %p165 = scmp.ne.s32.totalorder %s157, %s160
      %p166 = scmp.eq.s32.totalorder %s25, 0
      %p167 = por %p165, %p166
      %p168 = scmp.ne.s32.totalorder %s157, %s160
      %p169 = scmp.eq.s32.totalorder %s30, 1
      %p170 = por %p168, %p169
      %p171 = scmp.ne.s32.totalorder %s160, %s161
      %p172 = scmp.eq.s32.totalorder %s30, 0
      %p173 = por %p171, %p172
      %p174 = scmp.ne.s32.totalorder %s160, %s161
      %p175 = scmp.eq.s32.totalorder %s31, 1
      %p176 = por %p174, %p175
      %p178 = scmp.ne.s32.totalorder %s161, %s177
      %p179 = scmp.eq.s32.totalorder %s31, 0
      %p180 = por %p178, %p179
      %s181 = ssub.s32 %s33, %s40
      %s182 = ssub.s32 %s32, %s44
      %s183 = sor.u32 %s181, %s182
      %p184 = scmp.eq.s32.totalorder %s183, 0
      %s186 = sadd.s32 %s185, 1
      %s187 = scalar_select %p184, %s185, %s186
      %p190 = pneg %p184
      %p191 = scmp.eq.s32.totalorder %s25, 1
      %p192 = por %p190, %p191
      %p193 = scmp.ne.s32.totalorder %s185, %s188
      %p194 = scmp.eq.s32.totalorder %s25, 0
      %p195 = por %p193, %p194
      %p196 = scmp.ne.s32.totalorder %s185, %s188
      %p197 = scmp.eq.s32.totalorder %s30, 1
      %p198 = por %p196, %p197
      %p199 = scmp.ne.s32.totalorder %s188, %s189
      %p200 = scmp.eq.s32.totalorder %s30, 0
      %p201 = por %p199, %p200
      %p202 = scmp.ne.s32.totalorder %s188, %s189
      %p203 = scmp.eq.s32.totalorder %s31, 1
      %p204 = por %p202, %p203
      %p206 = scmp.ne.s32.totalorder %s189, %s205
      %p207 = scmp.eq.s32.totalorder %s31, 0
      %p208 = por %p206, %p207
      %p209 = scmp.le.s32.totalorder 1, %s25
      %p210 = scmp.lt.s32.totalorder %s25, 3
      %p211 = pnand %p209, %p210
      %p212 = pneg %p211
      // Predicated region
      $region9: #{tpu_custom_call.1} parent=5 // pred_check
        _
      $region10: #{tpu_custom_call.1} parent=5 // pred_check_branch
        %214 = sbr.rel (%p211) target = $region12
      $region11: #{tpu_custom_call.1} parent=5 // pred_region
        %s215 = ssub.s32 %s25, 1
        // Predicated region
        $region13: #{tpu_custom_call.1} parent=11 // pred_check
          %p216 = pneg %p119
        $region14: #{tpu_custom_call.1} parent=11 // pred_check_branch
          %218 = sbr.rel (%p216) target = $region16
        $region15: #{tpu_custom_call.1} parent=11 // pred_region
          %s220 = ssub.s32 256, 256
          %221 = vsyncadd [#allocation6], %s220
          %s222 = smul.addr %s34, 64
          %s223 = scalar_lea.hbm %s2, %s222
          %s224 = sshll.u32 [#allocation7], 4
          %s225 = int_to_ptr.vmem [resolvable:$true] %s224
          %230 = dma.hbm_to_vmem [thread:$0]  %s223, 256, %s225, [#allocation6], 64, 64, 4
        $region16: #{tpu_custom_call.1} parent=11 // pred_fallthru
          _
        // Predicated region
        $region17: #{tpu_custom_call.1} parent=11 // pred_check
          %p231 = pneg %p145
        $region18: #{tpu_custom_call.1} parent=11 // pred_check_branch
          %233 = sbr.rel (%p231) target = $region20
        $region19: #{tpu_custom_call.1} parent=11 // pred_region
          %s235 = ssub.s32 256, 256
          %236 = vsyncadd [#allocation9], %s235
          %s237 = smul.addr %s34, 64
          %s238 = scalar_lea.hbm %s3, %s237
          %s239 = sshll.u32 [#allocation8], 4
          %s240 = int_to_ptr.vmem [resolvable:$true] %s239
          %245 = dma.hbm_to_vmem [thread:$0]  %s238, 256, %s240, [#allocation9], 64, 64, 4
        $region20: #{tpu_custom_call.1} parent=11 // pred_fallthru
          _
      $region12: #{tpu_custom_call.1} parent=5 // pred_fallthru
        _
      %p246 = scmp.lt.s32.totalorder %s25, 2
      // Predicated region
      $region21: #{tpu_custom_call.1} parent=5 // pred_check
        %p247 = pneg %p246
      $region22: #{tpu_custom_call.1} parent=5 // pred_check_branch
        %249 = sbr.rel (%p247) target = $region24
      $region23: #{tpu_custom_call.1} parent=5 // pred_region
        // Predicated region
        $region25: #{tpu_custom_call.1} parent=23 // pred_check
          %p250 = pneg %p59
        $region26: #{tpu_custom_call.1} parent=23 // pred_check_branch
          %252 = sbr.rel (%p250) target = $region28
        $region27: #{tpu_custom_call.1} parent=23 // pred_region
          %s253 = sand.u32 %s49, 1
          %s254 = scalar_lea.sflag [#allocation3], %s253
          %s255 = sand.u32 %s49, 1
          %s256 = smul.addr %s255, 4
          %s257 = scalar_lea.vmem [#allocation2], %s256
          %s259 = ssub.s32 64, 64
          %260 = vsyncadd %s254, %s259
          %s261 = sadd.s32 %s32, %s33
          %s262 = smul.addr %s261, 64
          %s263 = scalar_lea.hbm %s0, %s262
          %s265 = sshll.u32 %s257, 4
          %s266 = int_to_ptr.vmem [resolvable:$true] %s265
          %268 = dma.hbm_to_vmem [thread:$0]  %s263, 64, %s266, %s254
        $region28: #{tpu_custom_call.1} parent=23 // pred_fallthru
          _
        // Predicated region
        $region29: #{tpu_custom_call.1} parent=23 // pred_check
          %p269 = pneg %p87
        $region30: #{tpu_custom_call.1} parent=23 // pred_check_branch
          %271 = sbr.rel (%p269) target = $region32
        $region31: #{tpu_custom_call.1} parent=23 // pred_region
          %s272 = sand.u32 %s25, 1
          %s273 = scalar_lea.sflag [#allocation6], %s272
          %s274 = sand.u32 %s77, 1
          %s275 = smul.addr %s274, 4
          %s276 = scalar_lea.vmem [#allocation5], %s275
          %s278 = ssub.s32 64, 64
          %279 = vsyncadd %s273, %s278
          %s280 = sadd.s32 %s32, %s33
          %s281 = smul.addr %s280, 64
          %s282 = scalar_lea.hbm %s1, %s281
          %s284 = sshll.u32 %s276, 4
          %s285 = int_to_ptr.vmem [resolvable:$true] %s284
          %287 = dma.hbm_to_vmem [thread:$0]  %s282, 64, %s285, %s273
        $region32: #{tpu_custom_call.1} parent=23 // pred_fallthru
          _
      $region24: #{tpu_custom_call.1} parent=5 // pred_fallthru
        _
      %p288 = scmp.le.s32.totalorder 1, %s25
      %p289 = scmp.lt.s32.totalorder %s25, 3
      %p290 = pnand %p288, %p289
      %p291 = pneg %p290
      // Predicated region
      $region33: #{tpu_custom_call.1} parent=5 // pred_check
        _
      $region34: #{tpu_custom_call.1} parent=5 // pred_check_branch
        %293 = sbr.rel (%p290) target = $region36
      $region35: #{tpu_custom_call.1} parent=5 // pred_region
        %s294 = ssub.s32 %s25, 1
        %s295 = sand.u32 %s52, 1
        %s296 = scalar_lea.sflag [#allocation3], %s295
        %s297 = sand.u32 %s52, 1
        %s298 = smul.addr %s297, 4
        %s299 = scalar_lea.vmem [#allocation2], %s298
        // Predicated region
        $region37: #{tpu_custom_call.1} parent=35 // pred_check
          %p300 = pneg %p65
        $region38: #{tpu_custom_call.1} parent=35 // pred_check_branch
          %302 = sbr.rel (%p300) target = $region40
        $region39: #{tpu_custom_call.1} parent=35 // pred_region
          %303 = dma.done %s296, 64
        $region40: #{tpu_custom_call.1} parent=35 // pred_fallthru
          _
        %s304 = sand.u32 %s30, 1
        %s305 = scalar_lea.sflag [#allocation6], %s304
        %s306 = sand.u32 %s80, 1
        %s307 = smul.addr %s306, 4
        %s308 = scalar_lea.vmem [#allocation5], %s307
        // Predicated region
        $region41: #{tpu_custom_call.1} parent=35 // pred_check
          %p309 = pneg %p93
        $region42: #{tpu_custom_call.1} parent=35 // pred_check_branch
          %311 = sbr.rel (%p309) target = $region44
        $region43: #{tpu_custom_call.1} parent=35 // pred_region
          %312 = dma.done %s305, 64
        $region44: #{tpu_custom_call.1} parent=35 // pred_fallthru
          _
        // Predicated region
        $region45: #{tpu_custom_call.1} parent=35 // pred_check
          %p313 = pneg %p119
        $region46: #{tpu_custom_call.1} parent=35 // pred_check_branch
          %315 = sbr.rel (%p313) target = $region48
        $region47: #{tpu_custom_call.1} parent=35 // pred_region
          %316 = dma.done [#allocation6], 256
        $region48: #{tpu_custom_call.1} parent=35 // pred_fallthru
          _
        // Predicated region
        $region49: #{tpu_custom_call.1} parent=35 // pred_check
          %p317 = pneg %p145
        $region50: #{tpu_custom_call.1} parent=35 // pred_check_branch
          %319 = sbr.rel (%p317) target = $region52
        $region51: #{tpu_custom_call.1} parent=35 // pred_region
          %320 = dma.done [#allocation9], 256
        $region52: #{tpu_custom_call.1} parent=35 // pred_fallthru
          _
        %s321 = sand.u32 %s52, 1
        %s322 = scalar_lea.sflag [#allocation3], %s321
        %s323 = sand.u32 %s52, 1
        %s324 = smul.addr %s323, 4
        %s325 = scalar_lea.vmem [#allocation2], %s324
        %p326 = pneg %p65
        %p327 = pneg %p62
        %s328 = sand.u32 %s30, 1
        %s329 = scalar_lea.sflag [#allocation6], %s328
        %s330 = sand.u32 %s80, 1
        %s331 = smul.addr %s330, 4
        %s332 = scalar_lea.vmem [#allocation5], %s331
        %p333 = pneg %p93
        %p334 = pneg %p90
        %p335 = pneg %p119
        %p336 = pneg %p116
        %p337 = pneg %p145
        %p338 = pneg %p142
        %p339 = pneg %p173
        %p340 = pneg %p170
        %s341 = sand.u32 %s160, 1
        %s342 = scalar_lea.sflag [#allocation4], %s341
        %s343 = sand.u32 %s160, 1
        %s344 = smul.addr %s343, 4
        %s345 = scalar_lea.vmem [#allocation10], %s344
        %p346 = pneg %p201
        %p347 = pneg %p198
        %s348 = sand.u32 %s188, 1
        %s349 = scalar_lea.sflag [#allocation12], %s348
        %s350 = sand.u32 %s188, 1
        %s351 = smul.addr %s350, 4
        %s352 = scalar_lea.vmem [#allocation11], %s351
        %v353 = vld [vmem:[%s299] sm:$0x1]
        %v354 = vld [vmem:[%s308] sm:$0x1]
        %v355 = vld [vmem:[#allocation7] sm:$0xf]
        %v356 = vld [vmem:[#allocation8] sm:$0xf]
        %v357 = vlaneseq
        %v358 = vshrl.u32 %v357, 7
        %v359 = vsub.s32 0, %v358
        %v360 = vrot.slane %v353, %v359
        %v361 = vmul.f32 %v360, %v355
        %v362 = vlaneseq
        %v363 = vshrl.u32 %v362, 7
        %v364 = vsub.s32 0, %v363
        %v365 = vrot.slane %v354, %v364
        %v366 = vmul.f32 %v365, %v356
        %v367 = vsub.f32 %v361, %v366
        %v368 = vmul.f32 %v360, %v356
        %v369 = vmul.f32 %v365, %v355
        %v370 = vadd.f32 %v368, %v369
        %v371 = vld [vmem:[%s299 + $0x1] sm:$0x1]
        %v372 = vld [vmem:[%s308 + $0x1] sm:$0x1]
        %s373 = scalar_lea.vmem [#allocation7], 4
        %v374 = vld [vmem:[%s373] sm:$0xf]
        %s375 = scalar_lea.vmem [#allocation8], 4
        %v376 = vld [vmem:[%s375] sm:$0xf]
        %v377 = vlaneseq
        %v378 = vshrl.u32 %v377, 7
        %v379 = vsub.s32 0, %v378
        %v380 = vrot.slane %v371, %v379
        %v381 = vmul.f32 %v380, %v374
        %v382 = vlaneseq
        %v383 = vshrl.u32 %v382, 7
        %v384 = vsub.s32 0, %v383
        %v385 = vrot.slane %v372, %v384
        %v386 = vmul.f32 %v385, %v376
        %v387 = vsub.f32 %v381, %v386
        %v388 = vmul.f32 %v380, %v376
        %v389 = vmul.f32 %v385, %v374
        %v390 = vadd.f32 %v388, %v389
        %v391 = vadd.f32 %v367, %v387
        %v392 = vadd.f32 %v370, %v390
        %v393 = vld [vmem:[%s299 + $0x2] sm:$0x1]
        %v394 = vld [vmem:[%s308 + $0x2] sm:$0x1]
        %s395 = scalar_lea.vmem [#allocation7], 8
        %v396 = vld [vmem:[%s395] sm:$0xf]
        %s397 = scalar_lea.vmem [#allocation8], 8
        %v398 = vld [vmem:[%s397] sm:$0xf]
        %v399 = vlaneseq
        %v400 = vshrl.u32 %v399, 7
        %v401 = vsub.s32 0, %v400
        %v402 = vrot.slane %v393, %v401
        %v403 = vmul.f32 %v402, %v396
        %v404 = vlaneseq
        %v405 = vshrl.u32 %v404, 7
        %v406 = vsub.s32 0, %v405
        %v407 = vrot.slane %v394, %v406
        %v408 = vmul.f32 %v407, %v398
        %v409 = vsub.f32 %v403, %v408
        %v410 = vmul.f32 %v402, %v398
        %v411 = vmul.f32 %v407, %v396
        %v412 = vadd.f32 %v410, %v411
        %v413 = vadd.f32 %v391, %v409
        %v414 = vadd.f32 %v392, %v412
        %v415 = vld [vmem:[%s299 + $0x3] sm:$0x1]
        %v416 = vld [vmem:[%s308 + $0x3] sm:$0x1]
        %s417 = scalar_lea.vmem [#allocation7], 12
        %v418 = vld [vmem:[%s417] sm:$0xf]
        %s419 = scalar_lea.vmem [#allocation8], 12
        %v420 = vld [vmem:[%s419] sm:$0xf]
        %v421 = vlaneseq
        %v422 = vshrl.u32 %v421, 7
        %v423 = vsub.s32 0, %v422
        %v424 = vrot.slane %v415, %v423
        %v425 = vmul.f32 %v424, %v418
        %v426 = vlaneseq
        %v427 = vshrl.u32 %v426, 7
        %v428 = vsub.s32 0, %v427
        %v429 = vrot.slane %v416, %v428
        %v430 = vmul.f32 %v429, %v420
        %v431 = vsub.f32 %v425, %v430
        %v432 = vmul.f32 %v424, %v420
        %v433 = vmul.f32 %v429, %v418
        %v434 = vadd.f32 %v432, %v433
        %v435 = vadd.f32 %v413, %v431
        %v436 = vadd.f32 %v414, %v434
        %vm437 = vcmask 60416
        %438 = vst.msk [vmem:[%s345] sm:$0xf] %vm437, %v435
        %439 = vst.msk [vmem:[%s352] sm:$0xf] %vm437, %v436
        %s440 = sand.u32 %s160, 1
        %s441 = scalar_lea.sflag [#allocation4], %s440
        %s442 = sand.u32 %s160, 1
        %s443 = smul.addr %s442, 4
        %s444 = scalar_lea.vmem [#allocation10], %s443
        %s445 = sand.u32 %s188, 1
        %s446 = scalar_lea.sflag [#allocation12], %s445
        %s447 = sand.u32 %s188, 1
        %s448 = smul.addr %s447, 4
        %s449 = scalar_lea.vmem [#allocation11], %s448
        // Predicated region
        $region53: #{tpu_custom_call.1} parent=35 // pred_check
          %p450 = pneg %p170
        $region54: #{tpu_custom_call.1} parent=35 // pred_check_branch
          %452 = sbr.rel (%p450) target = $region56
        $region55: #{tpu_custom_call.1} parent=35 // pred_region
          %s454 = ssub.s32 64, 64
          %455 = vsyncadd %s441, %s454
          %s456 = sadd.s32 %s34, %s35
          %s457 = smul.addr %s456, 64
          %s458 = scalar_lea.hbm %s4, %s457
          %s460 = sshll.u32 %s444, 4
          %s461 = int_to_ptr.vmem [resolvable:$true] %s460
          %463 = dma.vmem_to_hbm [thread:$0]  %s461, 64, %s458, %s441
        $region56: #{tpu_custom_call.1} parent=35 // pred_fallthru
          _
        // Predicated region
        $region57: #{tpu_custom_call.1} parent=35 // pred_check
          %p464 = pneg %p198
        $region58: #{tpu_custom_call.1} parent=35 // pred_check_branch
          %466 = sbr.rel (%p464) target = $region60
        $region59: #{tpu_custom_call.1} parent=35 // pred_region
          %s468 = ssub.s32 64, 64
          %469 = vsyncadd %s446, %s468
          %s470 = sadd.s32 %s34, %s35
          %s471 = smul.addr %s470, 64
          %s472 = scalar_lea.hbm %s5, %s471
          %s474 = sshll.u32 %s449, 4
          %s475 = int_to_ptr.vmem [resolvable:$true] %s474
          %477 = dma.vmem_to_hbm [thread:$0]  %s475, 64, %s472, %s446
        $region60: #{tpu_custom_call.1} parent=35 // pred_fallthru
          _
      $region36: #{tpu_custom_call.1} parent=5 // pred_fallthru
        _
      %p478 = scmp.le.s32.totalorder 2, %s25
      // Predicated region
      $region61: #{tpu_custom_call.1} parent=5 // pred_check
        %p479 = pneg %p478
      $region62: #{tpu_custom_call.1} parent=5 // pred_check_branch
        %481 = sbr.rel (%p479) target = $region64
      $region63: #{tpu_custom_call.1} parent=5 // pred_region
        %s482 = ssub.s32 %s25, 2
        // Predicated region
        $region65: #{tpu_custom_call.1} parent=63 // pred_check
          %p483 = pneg %p176
        $region66: #{tpu_custom_call.1} parent=63 // pred_check_branch
          %485 = sbr.rel (%p483) target = $region68
        $region67: #{tpu_custom_call.1} parent=63 // pred_region
          %s486 = sand.u32 %s161, 1
          %s487 = scalar_lea.sflag [#allocation4], %s486
          %s488 = sand.u32 %s161, 1
          %s489 = smul.addr %s488, 4
          %s490 = scalar_lea.vmem [#allocation10], %s489
          %491 = dma.done %s487, 64
        $region68: #{tpu_custom_call.1} parent=63 // pred_fallthru
          _
        // Predicated region
        $region69: #{tpu_custom_call.1} parent=63 // pred_check
          %p492 = pneg %p204
        $region70: #{tpu_custom_call.1} parent=63 // pred_check_branch
          %494 = sbr.rel (%p492) target = $region72
        $region71: #{tpu_custom_call.1} parent=63 // pred_region
          %s495 = sand.u32 %s189, 1
          %s496 = scalar_lea.sflag [#allocation12], %s495
          %s497 = sand.u32 %s189, 1
          %s498 = smul.addr %s497, 4
          %s499 = scalar_lea.vmem [#allocation11], %s498
          %500 = dma.done %s496, 64
        $region72: #{tpu_custom_call.1} parent=63 // pred_fallthru
          _
      $region64: #{tpu_custom_call.1} parent=5 // pred_fallthru
        _
    $region6: #{tpu_custom_call.1} parent=1 // loop_footer
      %s29 = sadd.s32 1, %s25
    $region7: #{tpu_custom_call.1} parent=1 // loop_footer_branch
      %24 = sbr.rel target = $region3
    $region8: #{tpu_custom_call.1} parent=1 // loop_exit
      _
    %501 = vsyncpa [#allocation3], 1
    %s502 = scalar_lea.sflag [#allocation3], 1
    %503 = vsyncpa %s502, 1
    %504 = vsyncpa [#allocation6], 1
    %s505 = scalar_lea.sflag [#allocation6], 1
    %506 = vsyncpa %s505, 1
    %507 = vsyncpa [#allocation9], 1
    %508 = vsyncpa [#allocation4], 1
    %s509 = scalar_lea.sflag [#allocation4], 1
    %510 = vsyncpa %s509, 1
    %511 = vsyncpa [#allocation12], 1
    %s512 = scalar_lea.sflag [#allocation12], 1
    %513 = vsyncpa %s512, 1

</llo_original>
